<compile_context>
chip_gen: v6e
topology: v6e:2x2x1
jax: 0.10.0
libtpu: 0.0.40
codegen_flags: <defaults>
</compile_context>

<pallas_src>
import functools
import math

import jax
import jax.numpy as jnp
from jax.experimental import pallas as pl
from jax.experimental.pallas import tpu as pltpu


def _make_kernel(activation, has_scale):
    """Builds a Pallas kernel specialized (statically) on activation / scale path."""

    def _act(y):
        if activation == "relu":
            return jnp.maximum(y, 0.0)
        if activation == "leakyrelu":
            return jnp.where(y >= 0.0, y, 0.1 * y)
        if activation == "elu":
            return jnp.where(y >= 0.0, y, jnp.exp(y) - 1.0)
        if activation == "prelu":
            # TODO(synk): PReLU slope fixed at torch's default init (0.25); not a
            # learnable parameter here.
            return jnp.where(y >= 0.0, y, 0.25 * y)
        return y

    if has_scale:
        # instance norm: per-(sample, channel) scale/shift (folded bias included)
        def kernel(x_ref, w_ref, scale_ref, shift_ref, o_ref):
            y = jnp.dot(w_ref[...], x_ref[...],
                        preferred_element_type=jnp.float32)      # (C_out, TL)
            y = y * scale_ref[...] + shift_ref[...]              # (C_out,1) bcast
            o_ref[...] = _act(y).astype(o_ref.dtype)
    else:
        # plain conv, or batch norm with scale folded into the weight
        def kernel(x_ref, w_ref, shift_ref, o_ref):
            y = jnp.dot(w_ref[...], x_ref[...],
                        preferred_element_type=jnp.float32)      # (C_out, TL)
            y = y + shift_ref[...]                               # (C_out,1) bcast
            o_ref[...] = _act(y).astype(o_ref.dtype)

    return kernel


def _choose_tile_l(l, c_in, c_out, budget_bytes=24 << 20):
    """Pick a lane-dense L tile that fits the per-step double-buffer budget."""

    def live_bytes(tl):
        # double-buffered f32 x block + out block
        return 2 * 4 * tl * (c_in + c_out)

    if l <= 1024 and live_bytes(l) <= budget_bytes:
        return l, l                                   # whole L in one block
    tl = 1024
    while tl > 128 and live_bytes(tl) > budget_bytes:
        tl //= 2
    lp = ((l + tl - 1) // tl) * tl                    # pad L up to the tile
    return tl, lp


class Conv1dWrapperPallas:
    """JAX/Pallas port of Conv1d_wrapper (forward pass, training-mode norms)."""

    def __init__(self, num_in_channels, num_out_channels,
                 normalization=None, activation=None, eps=1e-5, key=None):
        self.c_in = int(num_in_channels)
        self.c_out = int(num_out_channels)
        self.normalization = normalization
        self.activation = activation
        self.eps = float(eps)

        if key is None:
            key = jax.random.PRNGKey(0)
        # weight_init(): Conv1d weight ~ N(0, sqrt(2 / (kernel_size * in_channels)))
        std = math.sqrt(2.0 / (1 * num_in_channels))
        self.w = std * jax.random.normal(
            key, (self.c_out, self.c_in), dtype=jnp.float32)
        # bias filled with 0; norm affine params weight=1, bias=0.
        # Stored as (C_out, 1) columns (channel on sublane axis).
        self.b = jnp.zeros((self.c_out, 1), dtype=jnp.float32)
        self.gamma = jnp.ones((self.c_out, 1), dtype=jnp.float32)
        self.beta = jnp.zeros((self.c_out, 1), dtype=jnp.float32)
        # TODO(synk): BatchNorm1d running_mean/running_var updates and the
        # epoch-based momentum decay are training-side state; forward here always
        # uses batch statistics (the module's training-mode behavior).

        self._kernel = _make_kernel(activation, normalization == "instance")

    # ---- fold conv bias + (optional) norm into effective weight / scale / shift ----
    def _fold_params(self, x):
        hp = jax.lax.Precision.HIGHEST
        if self.normalization == "batch":
            n, c_in, l = x.shape
            xf = jnp.transpose(x, (1, 0, 2)).reshape(c_in, n * l)       # (C_in, NL)
            mean_x = jnp.mean(xf, axis=1, keepdims=True)                # (C_in, 1)
            xc = xf - mean_x
            cov = jnp.dot(xc, xc.T, precision=hp) / (n * l)             # (C_in, C_in)
            mean_y = jnp.dot(self.w, mean_x, precision=hp) + self.b     # (C_out, 1)
            var_y = jnp.sum(jnp.dot(self.w, cov, precision=hp) * self.w,
                            axis=1, keepdims=True)                      # (C_out, 1)
            s = self.gamma * jax.lax.rsqrt(var_y + self.eps)            # (C_out, 1)
            w_eff = s * self.w                                          # fold scale
            shift = self.beta + s * (self.b - mean_y)                   # (C_out, 1)
            return w_eff, None, shift

        if self.normalization == "instance":
            n, c_in, l = x.shape
            mean_x = jnp.mean(x, axis=2)                                # (N, C_in)
            xc = x - mean_x[:, :, None]
            cov = jnp.einsum("ncl,nkl->nck", xc, xc, precision=hp) / l  # (N,C_in,C_in)
            mean_y = (jnp.einsum("oc,nc->no", self.w, mean_x, precision=hp)
                      + self.b[:, 0][None, :])                          # (N, C_out)
            var_y = jnp.einsum("oc,nck,ok->no", self.w, cov, self.w,
                               precision=hp)                            # (N, C_out)
            s = self.gamma[:, 0][None, :] * jax.lax.rsqrt(var_y + self.eps)
            shift = self.beta[:, 0][None, :] + s * (self.b[:, 0][None, :] - mean_y)
            return self.w, s[:, :, None], shift[:, :, None]             # (N,C_out,1)

        # no normalization: shift is just the conv bias
        return self.w, None, self.b

    @functools.partial(jax.jit, static_argnums=0)
    def __call__(self, x):
        n, c_in, l = x.shape
        assert c_in == self.c_in
        c_out = self.c_out

        w_eff, scale, shift = self._fold_params(x)

        tl, lp = _choose_tile_l(l, c_in, c_out)
        if lp != l:
            x = jnp.pad(x, ((0, 0), (0, 0), (0, lp - l)))
        num_l = lp // tl

        x_spec = pl.BlockSpec((pl.Squeezed(), c_in, tl),
                              lambda ni, li: (ni, 0, li))
        w_spec = pl.BlockSpec((c_out, c_in), lambda ni, li: (0, 0))      # resident
        o_spec = pl.BlockSpec((pl.Squeezed(), c_out, tl),
                              lambda ni, li: (ni, 0, li))

        if scale is None:
            operands = (x, w_eff, shift)
            in_specs = [x_spec, w_spec,
                        pl.BlockSpec((c_out, 1), lambda ni, li: (0, 0))]  # resident
        else:
            per_n_vec = pl.BlockSpec((pl.Squeezed(), c_out, 1),
                                     lambda ni, li: (ni, 0, 0))
            operands = (x, w_eff, scale, shift)
            in_specs = [x_spec, w_spec, per_n_vec, per_n_vec]

        # advisory cost estimate
        flops = int(2 * n * lp * c_in * c_out)
        trans = int(n * lp * c_out) if self.activation == "elu" else 0
        bytes_accessed = int(4 * (n * c_in * lp + n * c_out * lp + c_in * c_out
                                  + 4 * c_out * max(n, 1)))

        # VMEM budget: double-buffered x/out blocks + resident weight & vectors
        vmem_need = (2 * 4 * tl * (c_in + c_out)
                     + 4 * (c_out * c_in + 4 * c_out) + (2 << 20))
        vmem_limit = int(min(max(vmem_need, 8 << 20), 48 << 20))

        out = pl.pallas_call(
            self._kernel,
            out_shape=jax.ShapeDtypeStruct((n, c_out, lp), jnp.float32),
            grid=(n, num_l),
            in_specs=in_specs,
            out_specs=o_spec,
            compiler_params=pltpu.CompilerParams(
                dimension_semantics=("parallel", "parallel"),
                vmem_limit_bytes=vmem_limit),
            cost_estimate=pl.CostEstimate(
                flops=flops, transcendentals=trans,
                bytes_accessed=bytes_accessed),
        )(*operands)

        if lp != l:
            out = out[:, :, :l]
        return out


if __name__ == "__main__":
    key = jax.random.PRNGKey(0)
    k_x, k1, k2, k3, k4, k_x2 = jax.random.split(key, 6)

    N, C_in, C_out, L = 2, 4, 8, 16
    x = jax.random.normal(k_x, (N, C_in, L), dtype=jnp.float32)

    # ---- plain conv (no norm, no activation) ----
    m0 = Conv1dWrapperPallas(C_in, C_out, normalization=None, activation=None, key=k1)
    y0 = jax.block_until_ready(m0(x))
    ref0 = jnp.einsum("oc,ncl->nol", m0.w, x) + m0.b[None, :, :]
    assert y0.shape == (N, C_out, L)
    assert bool(jnp.allclose(y0, ref0, atol=1e-1, rtol=1e-1))

    # ---- batch norm + relu ----
    m1 = Conv1dWrapperPallas(C_in, C_out, normalization="batch", activation="relu",
                             key=k2)
    y1 = jax.block_until_ready(m1(x))
    assert y1.shape == (N, C_out, L)
    assert bool(jnp.all(y1 >= 0.0))
    y_lin = jnp.einsum("oc,ncl->nol", m1.w, x) + m1.b[None, :, :]
    mu = jnp.mean(y_lin, axis=(0, 2), keepdims=True)
    var = jnp.mean((y_lin - mu) ** 2, axis=(0, 2), keepdims=True)
    ref1 = jnp.maximum((y_lin - mu) * jax.lax.rsqrt(var + 1e-5), 0.0)
    assert bool(jnp.allclose(y1, ref1, atol=1e-1, rtol=1e-1))

    # ---- instance norm (check per-(n, c) mean ~ 0, var ~ 1) ----
    m2 = Conv1dWrapperPallas(C_in, C_out, normalization="instance", activation=None,
                             key=k3)
    y2 = jax.block_until_ready(m2(x))
    assert y2.shape == (N, C_out, L)
    assert bool(jnp.max(jnp.abs(jnp.mean(y2, axis=2))) < 5e-2)
    assert bool(jnp.max(jnp.abs(jnp.var(y2, axis=2) - 1.0)) < 5e-2)

    # ---- elu activation path ----
    m3 = Conv1dWrapperPallas(C_in, C_out, normalization=None, activation="elu", key=k4)
    y3 = jax.block_until_ready(m3(x))
    assert bool(jnp.all(jnp.isfinite(y3)))
    assert bool(jnp.all(y3 >= -1.0 - 1e-5))

    # ---- tiled / padded path (L > 1024 exercises the L-tile grid + padding) ----
    L2 = 1500
    x2 = jax.random.normal(k_x2, (N, C_in, L2), dtype=jnp.float32)
    y4 = jax.block_until_ready(m0(x2))
    ref4 = jnp.einsum("oc,ncl->nol", m0.w, x2) + m0.b[None, :, :]
    assert y4.shape == (N, C_out, L2)
    assert bool(jnp.allclose(y4, ref4, atol=1e-1, rtol=1e-1))

    print("KERNEL_OK")
</pallas_src>

<mosaic_0001>
module attributes {stable_mosaic.version = 11 : i64} {
  func.func @kernel(%arg0: i32, %arg1: i32, %arg2: memref<1x4x16xf32, #tpu.memory_space<vmem>>, %arg3: memref<8x4xf32, #tpu.memory_space<vmem>>, %arg4: memref<8x1xf32, #tpu.memory_space<vmem>>, %arg5: memref<1x8x16xf32, #tpu.memory_space<vmem>>) attributes {dimension_semantics = [#tpu.dimension_semantics<parallel>, #tpu.dimension_semantics<parallel>], iteration_bounds = array<i64: 2, 1>, scalar_prefetch = 0 : i64, scratch_operands = 0 : i64, tpu.core_type = #tpu.core_type<tc>, window_params = [{transform_indices = @transform_0, window_bounds = array<i64: 1, 4, 16>}, {pipeline_mode = #tpu.pipeline_mode<synchronous>, transform_indices = @transform_1, window_bounds = array<i64: 8, 4>}, {pipeline_mode = #tpu.pipeline_mode<synchronous>, transform_indices = @transform_2, window_bounds = array<i64: 8, 1>}, {transform_indices = @transform_3, window_bounds = array<i64: 1, 8, 16>}]} {
    %c0 = arith.constant 0 : index
    %c0_0 = arith.constant 0 : index
    %0 = vector.load %arg3[%c0, %c0_0] : memref<8x4xf32, #tpu.memory_space<vmem>>, vector<8x4xf32>
    %c0_1 = arith.constant 0 : index
    %c0_2 = arith.constant 0 : index
    %c0_3 = arith.constant 0 : index
    %1 = vector.load %arg2[%c0_1, %c0_2, %c0_3] : memref<1x4x16xf32, #tpu.memory_space<vmem>>, vector<1x4x16xf32>
    %2 = vector.shape_cast %1 : vector<1x4x16xf32> to vector<4x16xf32>
    %cst = arith.constant dense<0.000000e+00> : vector<8x16xf32>
    %3 = tpu.matmul %0, %2, %cst {dimension_numbers = #tpu.dot_dimension_numbers<[1], [0], [0], [1], [0, 0, 1, 1], [], []>} : vector<8x4xf32>, vector<4x16xf32>, vector<8x16xf32> -> vector<8x16xf32>
    %c0_4 = arith.constant 0 : index
    %c0_5 = arith.constant 0 : index
    %4 = vector.load %arg4[%c0_4, %c0_5] : memref<8x1xf32, #tpu.memory_space<vmem>>, vector<8x1xf32>
    %5 = vector.broadcast %4 : vector<8x1xf32> to vector<8x16xf32>
    %6 = arith.addf %3, %5 : vector<8x16xf32>
    %c0_6 = arith.constant 0 : index
    %c0_7 = arith.constant 0 : index
    %c0_8 = arith.constant 0 : index
    %7 = vector.load %arg5[%c0_6, %c0_7, %c0_8] : memref<1x8x16xf32, #tpu.memory_space<vmem>>, vector<1x8x16xf32>
    %8 = vector.shape_cast %7 : vector<1x8x16xf32> to vector<8x16xf32>
    %9 = vector.shape_cast %6 : vector<8x16xf32> to vector<1x8x16xf32>
    tpu.vector_store %arg5[%c0_6, %c0_7, %c0_8], %9 {strides = array<i32>} : memref<1x8x16xf32, #tpu.memory_space<vmem>>, vector<1x8x16xf32>,
    return
  }
  func.func @transform_0(%arg0: i32, %arg1: i32) -> (i32, i32, i32) {
    %c0_i32 = arith.constant 0 : i32
    %c0_i32_0 = arith.constant 0 : i32
    return %arg0, %c0_i32, %arg1 : i32, i32, i32
  }
  func.func @transform_1(%arg0: i32, %arg1: i32) -> (i32, i32) {
    %c0_i32 = arith.constant 0 : i32
    %c0_i32_0 = arith.constant 0 : i32
    %c0_i32_1 = arith.constant 0 : i32
    return %c0_i32, %c0_i32_0 : i32, i32
  }
  func.func @transform_2(%arg0: i32, %arg1: i32) -> (i32, i32) {
    %c0_i32 = arith.constant 0 : i32
    %c0_i32_0 = arith.constant 0 : i32
    %c0_i32_1 = arith.constant 0 : i32
    return %c0_i32, %c0_i32_0 : i32, i32
  }
  func.func @transform_3(%arg0: i32, %arg1: i32) -> (i32, i32, i32) {
    %c0_i32 = arith.constant 0 : i32
    %c0_i32_0 = arith.constant 0 : i32
    return %arg0, %c0_i32, %arg1 : i32, i32, i32
  }
}

</mosaic_0001>

<llo_original>
// kernel: a_call__.1
$region0: #{a_call__.1}
  #allocation0 [shape = 'u32[]', space=smem, size = 0x4, offset = 0x4, fixed_abs, tag = 'smem constant byte address 0x4 - core index']
  #allocation1 [shape = 'u32[144,128]{1,0:T(1,128)}', space=vmem, size = 0x12000, scoped, tag = 'internal scratch']
  %s0 = inlined_call_operand.vmem [shape: f32[2,4,16], index: 0, kind: input, shape index: {}]
  %s1 = inlined_call_operand.hbm [shape: f32[8,4], index: 1, kind: input, shape index: {}]
  %s2 = inlined_call_operand.vmem [shape: f32[8,1], index: 2, kind: input, shape index: {}]
  %s3 = inlined_call_operand.hbm [shape: f32[2,8,16], index: 3, kind: output, shape index: {}]
  %s4 = sld [smem:[#allocation0]]
  $region49: #{a_call__.1} parent=0
    _
  %s6 = ssub.s32 1, %s4
  %s7 = scalar_select 0, %s6, %s4
  $region1: #{a_call__.1} parent=0
    #allocation2 [shape = 'u8[4096]{0}', space=vmem, size = 0x1000, scoped, tag = 'input window, operand 1, single buffered']
    #allocation3 [shape = 's32[2]{0}', space=sflag, size = 0x8, scoped, tag = 'scoped memory for a_call__.1']
    #allocation4 [shape = 's32[2]{0}', space=sflag, size = 0x8, scoped, tag = 'scoped memory for a_call__.1']
    #allocation5 [shape = 'u8[8192]{0}', space=vmem, size = 0x2000, scoped, tag = 'output window, operand 0']
    %8 = vsyncpa [#allocation3], 0
    %9 = vsyncpa [#allocation4], 0
    %s10 = scalar_lea.sflag [#allocation4], 1
    %11 = vsyncpa %s10, 0
    loop: start=0, step=1, limit=4
    $region2: #{a_call__.1} parent=1 // loop_pre_header
      _
    $region3: #{a_call__.1} parent=1 // loop_header
      %s13 = sphi 0, %s17
      %p14 = scmp.ge.s32.totalorder %s13, 4
      %s20 = sphi 0, %s32
      %s21 = sphi 0, %s28
      %s22 = sphi 0, %s20
      %s23 = sphi 0, %s21
      %s24 = sphi 0, %s22
      %s25 = sphi 0, %s23
      %s37 = sphi 0, %s39
      %s40 = sphi 0, %s37
      %s41 = sphi 0, %s40
      %s57 = sphi 0, %s41
      %s61 = sphi 0, %s61
      %s63 = sphi 0, %s61
      %s64 = sphi 0, %s63
      %s78 = sphi 0, %s64
      %s82 = sphi 0, %s82
      %s84 = sphi 0, %s82
      %s85 = sphi 0, %s84
      %s99 = sphi 0, %s85
      %s107 = sphi 0, %s109
      %s110 = sphi 0, %s107
      %s111 = sphi 0, %s110
      %s127 = sphi 0, %s111
    $region4: #{a_call__.1} parent=1 // loop_header_branch
      %16 = sbr.rel (%p14) target = $region8
    $region5: #{a_call__.1} parent=1 // loop_body
      %s18 = ssub.s32 %s13, 1
      %s19 = ssub.s32 %s13, 2
      %s26 = sadd.s32 1, %s21
      %p27 = scmp.ge.s32.totalorder %s26, 1
      %s28 = scalar_select %p27, 0, %s26
      %s29 = sadd.s32 1, %s20
      %s30 = scalar_select %p27, %s29, %s20
      %p31 = scmp.ge.s32.totalorder %s30, 2
      %s32 = scalar_select %p31, 0, %s30
      %s33 = ssub.s32 %s20, %s32
      %s34 = ssub.s32 %s21, %s28
      %s35 = sor.u32 %s33, %s34
      %p36 = scmp.eq.s32.totalorder %s35, 0
      %s38 = sadd.s32 %s37, 1
      %s39 = scalar_select %p36, %s37, %s38
      %p42 = pneg %p36
      %p43 = scmp.eq.s32.totalorder %s13, 1
      %p44 = por %p42, %p43
      %p45 = scmp.ne.s32.totalorder %s37, %s40
      %p46 = scmp.eq.s32.totalorder %s13, 0
      %p47 = por %p45, %p46
      %p48 = scmp.ne.s32.totalorder %s37, %s40
      %p49 = scmp.eq.s32.totalorder %s18, 1
      %p50 = por %p48, %p49
      %p51 = scmp.ne.s32.totalorder %s40, %s41
      %p52 = scmp.eq.s32.totalorder %s18, 0
      %p53 = por %p51, %p52
      %p54 = scmp.ne.s32.totalorder %s40, %s41
      %p55 = scmp.eq.s32.totalorder %s19, 1
      %p56 = por %p54, %p55
      %p58 = scmp.ne.s32.totalorder %s41, %s57
      %p59 = scmp.eq.s32.totalorder %s19, 0
      %p60 = por %p58, %p59
      %s62 = sadd.s32 %s61, 1
      %p65 = scmp.eq.s32.totalorder %s13, 1
      %p66 = scmp.ne.s32.totalorder %s61, %s63
      %p67 = scmp.eq.s32.totalorder %s13, 0
      %p68 = por %p66, %p67
      %p69 = scmp.ne.s32.totalorder %s61, %s63
      %p70 = scmp.eq.s32.totalorder %s18, 1
      %p71 = por %p69, %p70
      %p72 = scmp.ne.s32.totalorder %s63, %s64
      %p73 = scmp.eq.s32.totalorder %s18, 0
      %p74 = por %p72, %p73
      %p75 = scmp.ne.s32.totalorder %s63, %s64
      %p76 = scmp.eq.s32.totalorder %s19, 1
      %p77 = por %p75, %p76
      %p79 = scmp.ne.s32.totalorder %s64, %s78
      %p80 = scmp.eq.s32.totalorder %s19, 0
      %p81 = por %p79, %p80
      %s83 = sadd.s32 %s82, 1
      %p86 = scmp.eq.s32.totalorder %s13, 1
      %p87 = scmp.ne.s32.totalorder %s82, %s84
      %p88 = scmp.eq.s32.totalorder %s13, 0
      %p89 = por %p87, %p88
      %p90 = scmp.ne.s32.totalorder %s82, %s84
      %p91 = scmp.eq.s32.totalorder %s18, 1
      %p92 = por %p90, %p91
      %p93 = scmp.ne.s32.totalorder %s84, %s85
      %p94 = scmp.eq.s32.totalorder %s18, 0
      %p95 = por %p93, %p94
      %p96 = scmp.ne.s32.totalorder %s84, %s85
      %p97 = scmp.eq.s32.totalorder %s19, 1
      %p98 = por %p96, %p97
      %p100 = scmp.ne.s32.totalorder %s85, %s99
      %p101 = scmp.eq.s32.totalorder %s19, 0
      %p102 = por %p100, %p101
      %s103 = ssub.s32 %s20, %s32
      %s104 = ssub.s32 %s21, %s28
      %s105 = sor.u32 %s103, %s104
      %p106 = scmp.eq.s32.totalorder %s105, 0
      %s108 = sadd.s32 %s107, 1
      %s109 = scalar_select %p106, %s107, %s108
      %p112 = pneg %p106
      %p113 = scmp.eq.s32.totalorder %s13, 1
      %p114 = por %p112, %p113
      %p115 = scmp.ne.s32.totalorder %s107, %s110
      %p116 = scmp.eq.s32.totalorder %s13, 0
      %p117 = por %p115, %p116
      %p118 = scmp.ne.s32.totalorder %s107, %s110
      %p119 = scmp.eq.s32.totalorder %s18, 1
      %p120 = por %p118, %p119
      %p121 = scmp.ne.s32.totalorder %s110, %s111
      %p122 = scmp.eq.s32.totalorder %s18, 0
      %p123 = por %p121, %p122
      %p124 = scmp.ne.s32.totalorder %s110, %s111
      %p125 = scmp.eq.s32.totalorder %s19, 1
      %p126 = por %p124, %p125
      %p128 = scmp.ne.s32.totalorder %s111, %s127
      %p129 = scmp.eq.s32.totalorder %s19, 0
      %p130 = por %p128, %p129
      %p131 = scmp.le.s32.totalorder 1, %s13
      %p132 = scmp.lt.s32.totalorder %s13, 3
      %p133 = pnand %p131, %p132
      %p134 = pneg %p133
      // Predicated region
      $region9: #{a_call__.1} parent=5 // pred_check
        _
      $region10: #{a_call__.1} parent=5 // pred_check_branch
        %136 = sbr.rel (%p133) target = $region12
      $region11: #{a_call__.1} parent=5 // pred_region
        %s137 = ssub.s32 %s13, 1
        // Predicated region
        $region13: #{a_call__.1} parent=11 // pred_check
          %p138 = pneg %p74
        $region14: #{a_call__.1} parent=11 // pred_check_branch
          %140 = sbr.rel (%p138) target = $region16
        $region15: #{a_call__.1} parent=11 // pred_region
          %s142 = ssub.s32 128, 128
          %143 = vsyncadd [#allocation3], %s142
          %s145 = sshll.u32 [#allocation2], 4
          %s146 = int_to_ptr.vmem [resolvable:$true] %s145
          %148 = dma.hbm_to_vmem [thread:$0]  %s1, 128, %s146, [#allocation3]
        $region16: #{a_call__.1} parent=11 // pred_fallthru
          _
        // Predicated region
        $region17: #{a_call__.1} parent=11 // pred_check
          %p149 = pneg %p95
        $region18: #{a_call__.1} parent=11 // pred_check_branch
          %151 = sbr.rel (%p149) target = $region20
        $region19: #{a_call__.1} parent=11 // pred_region
          _
        $region20: #{a_call__.1} parent=11 // pred_fallthru
          _
      $region12: #{a_call__.1} parent=5 // pred_fallthru
        _
      %p152 = scmp.lt.s32.totalorder %s13, 2
      // Predicated region
      $region21: #{a_call__.1} parent=5 // pred_check
        %p153 = pneg %p152
      $region22: #{a_call__.1} parent=5 // pred_check_branch
        %155 = sbr.rel (%p153) target = $region24
      $region23: #{a_call__.1} parent=5 // pred_region
        // Predicated region
        $region25: #{a_call__.1} parent=23 // pred_check
          %p156 = pneg %p47
        $region26: #{a_call__.1} parent=23 // pred_check_branch
          %158 = sbr.rel (%p156) target = $region28
        $region27: #{a_call__.1} parent=23 // pred_region
          %p159 = scmp.lt.s32.totalorder %s20, 1
          %s160 = scalar_select %p159, %s20, 1
          %p161 = scmp.lt.s32.totalorder %s21, 0
          %s162 = scalar_select %p161, %s21, 0
          %s163 = sadd.s32 %s162, %s160
          %s164 = smul.addr %s163, 4
          %s165 = scalar_lea.vmem %s0, %s164
        $region28: #{a_call__.1} parent=23 // pred_fallthru
          _
      $region24: #{a_call__.1} parent=5 // pred_fallthru
        _
      %p166 = scmp.le.s32.totalorder 1, %s13
      %p167 = scmp.lt.s32.totalorder %s13, 3
      %p168 = pnand %p166, %p167
      %p169 = pneg %p168
      // Predicated region
      $region29: #{a_call__.1} parent=5 // pred_check
        _
      $region30: #{a_call__.1} parent=5 // pred_check_branch
        %171 = sbr.rel (%p168) target = $region32
      $region31: #{a_call__.1} parent=5 // pred_region
        %s172 = ssub.s32 %s13, 1
        // Predicated region
        $region33: #{a_call__.1} parent=31 // pred_check
          %p173 = pneg %p74
        $region34: #{a_call__.1} parent=31 // pred_check_branch
          %175 = sbr.rel (%p173) target = $region36
        $region35: #{a_call__.1} parent=31 // pred_region
          %176 = dma.done [#allocation3], 128
        $region36: #{a_call__.1} parent=31 // pred_fallthru
          _
        %p177 = scmp.lt.s32.totalorder %s22, 1
        %s178 = scalar_select %p177, %s22, 1
        %p179 = scmp.lt.s32.totalorder %s23, 0
        %s180 = scalar_select %p179, %s23, 0
        %s181 = sadd.s32 %s180, %s178
        %s182 = smul.addr %s181, 4
        %s183 = scalar_lea.vmem %s0, %s182
        %p184 = pneg %p53
        %p185 = pneg %p50
        %p186 = pneg %p74
        %p187 = pneg %p71
        %p188 = pneg %p95
        %p189 = pneg %p92
        %p190 = pneg %p123
        %p191 = pneg %p120
        %s192 = sand.u32 %s110, 1
        %s193 = scalar_lea.sflag [#allocation4], %s192
        %s194 = sand.u32 %s110, 1
        %s195 = smul.addr %s194, 8
        %s196 = scalar_lea.vmem [#allocation5], %s195
        %p197 = scmp.lt.s32.totalorder %s22, 1
        %s198 = scalar_select %p197, %s22, 1
        %p199 = scmp.lt.s32.totalorder %s23, 0
        %s200 = scalar_select %p199, %s23, 0
        %s201 = sadd.s32 %s200, %s198
        %s202 = smul.addr %s201, 4
        %s203 = scalar_lea.vmem %s0, %s202
        %v204 = vld [vmem:[#allocation2] sm:$0xff]
        %v205 = vld [vmem:[%s203] sm:$0xf]
        %v206 = vld [vmem:[%s2] sm:$0xff]
        %208 = vset.pattern.permute.xlu0 0
        %209 = vperm.xlu0 %208, %v206
        %v210 = vpop.permute.xlu0 %209
        %vm212 = vcmask 31744
        %v214 = vsel %vm212, %v204, 0
        %vm216 = vcmask 1043456
        %v218 = vsel %vm216, %v205, 0
        %220 = vmatprep.subr.mxu0 0.0
        %221 = vmatpush1.msra.mxu0 0.0
        %222 = vmatprep.subr.mxu0 0.0
        %223 = vmatpush1.msra.mxu0 0.0
        %224 = vmatprep.subr.mxu0 0.0
        %225 = vmatpush1.msra.mxu0 0.0
        %226 = vmatprep.subr.mxu0 0.0
        %227 = vmatpush1.msra.mxu0 0.0
        %228 = vmatprep.subr.mxu0 0.0
        %229 = vmatpush1.msra.mxu0 0.0
        %230 = vmatprep.subr.mxu0 0.0
        %231 = vmatpush1.msra.mxu0 0.0
        %232 = vmatprep.subr.mxu0 0.0
        %233 = vmatpush1.msra.mxu0 0.0
        %234 = vmatprep.subr.mxu0 0.0
        %235 = vmatpush1.msra.mxu0 0.0
        %236 = vmatprep.subr.mxu0 0.0
        %237 = vmatpush1.msra.mxu0 0.0
        %238 = vmatprep.subr.mxu0 0.0
        %239 = vmatpush1.msra.mxu0 0.0
        %240 = vmatprep.subr.mxu0 0.0
        %241 = vmatpush1.msra.mxu0 0.0
        %242 = vmatprep.subr.mxu0 0.0
        %243 = vmatpush1.msra.mxu0 0.0
        %244 = vmatprep.subr.mxu0 0.0
        %245 = vmatpush1.msra.mxu0 0.0
        %246 = vmatprep.subr.mxu0 0.0
        %247 = vmatpush1.msra.mxu0 0.0
        %248 = vmatprep.subr.mxu0 0.0
        %249 = vmatpush1.msra.mxu0 0.0
        %250 = vmatprep.subr.mxu0 0.0
        %251 = vmatpush1.msra.mxu0 %v218
        %252 = vmatprep.subr.mxu0 0.0
        %253 = vmatpush2.msra.mxu0 0.0
        %254 = vmatprep.subr.mxu0 0.0
        %255 = vmatpush2.msra.mxu0 0.0
        %256 = vmatprep.subr.mxu0 0.0
        %257 = vmatpush2.msra.mxu0 0.0
        %258 = vmatprep.subr.mxu0 0.0
        %259 = vmatpush2.msra.mxu0 0.0
        %260 = vmatprep.subr.mxu0 0.0
        %261 = vmatpush2.msra.mxu0 0.0
        %262 = vmatprep.subr.mxu0 0.0
        %263 = vmatpush2.msra.mxu0 0.0
        %264 = vmatprep.subr.mxu0 0.0
        %265 = vmatpush2.msra.mxu0 0.0
        %266 = vmatprep.subr.mxu0 0.0
        %267 = vmatpush2.msra.mxu0 0.0
        %268 = vmatprep.subr.mxu0 0.0
        %269 = vmatpush2.msra.mxu0 0.0
        %270 = vmatprep.subr.mxu0 0.0
        %271 = vmatpush2.msra.mxu0 0.0
        %272 = vmatprep.subr.mxu0 0.0
        %273 = vmatpush2.msra.mxu0 0.0
        %274 = vmatprep.subr.mxu0 0.0
        %275 = vmatpush2.msra.mxu0 0.0
        %276 = vmatprep.subr.mxu0 0.0
        %277 = vmatpush2.msra.mxu0 0.0
        %278 = vmatprep.subr.mxu0 0.0
        %279 = vmatpush2.msra.mxu0 0.0
        %280 = vmatprep.subr.mxu0 0.0
        %281 = vmatpush2.msra.mxu0 0.0
        %282 = vmatprep.subr.mxu0 0.0
        %283 = vmatpush2.msra.mxu0 0.0
        %284 = vmatprep.mubr.f32.mxu0 0.0
        %285 = vmatmul.mubr.f32.gmra.mxu0 %v214
        %v286 = vpop.f32.mrf.mxu0
        %v287 = vadd.f32 %v210, %v286
        %v288 = vpop.f32.mrf.mxu0
        %289 = vdwg.mxu0
        %vm290 = vcmask 130048
        %291 = vst.msk [vmem:[%s196] sm:$0xff] %vm290, %v287
        %s292 = sand.u32 %s110, 1
        %s293 = scalar_lea.sflag [#allocation4], %s292
        %s294 = sand.u32 %s110, 1
        %s295 = smul.addr %s294, 8
        %s296 = scalar_lea.vmem [#allocation5], %s295
        // Predicated region
        $region37: #{a_call__.1} parent=31 // pred_check
          %p297 = pneg %p120
        $region38: #{a_call__.1} parent=31 // pred_check_branch
          %299 = sbr.rel (%p297) target = $region40
        $region39: #{a_call__.1} parent=31 // pred_region
          %s301 = ssub.s32 128, 128
          %302 = vsyncadd %s293, %s301
          %s303 = sadd.s32 %s23, %s22
          %s304 = smul.addr %s303, 128
          %s305 = scalar_lea.hbm %s3, %s304
          %s307 = sshll.u32 %s296, 4
          %s308 = int_to_ptr.vmem [resolvable:$true] %s307
          %310 = dma.vmem_to_hbm [thread:$0]  %s308, 128, %s305, %s293
        $region40: #{a_call__.1} parent=31 // pred_fallthru
          _
      $region32: #{a_call__.1} parent=5 // pred_fallthru
        _
      %p311 = scmp.le.s32.totalorder 2, %s13
      // Predicated region
      $region41: #{a_call__.1} parent=5 // pred_check
        %p312 = pneg %p311
      $region42: #{a_call__.1} parent=5 // pred_check_branch
        %314 = sbr.rel (%p312) target = $region44
      $region43: #{a_call__.1} parent=5 // pred_region
        %s315 = ssub.s32 %s13, 2
        // Predicated region
        $region45: #{a_call__.1} parent=43 // pred_check
          %p316 = pneg %p126
        $region46: #{a_call__.1} parent=43 // pred_check_branch
          %318 = sbr.rel (%p316) target = $region48
        $region47: #{a_call__.1} parent=43 // pred_region
          %s319 = sand.u32 %s111, 1
          %s320 = scalar_lea.sflag [#allocation4], %s319
          %s321 = sand.u32 %s111, 1
          %s322 = smul.addr %s321, 8
          %s323 = scalar_lea.vmem [#allocation5], %s322
          %324 = dma.done %s320, 128
        $region48: #{a_call__.1} parent=43 // pred_fallthru
          _
      $region44: #{a_call__.1} parent=5 // pred_fallthru
        _
    $region6: #{a_call__.1} parent=1 // loop_footer
      %s17 = sadd.s32 1, %s13
    $region7: #{a_call__.1} parent=1 // loop_footer_branch
      %12 = sbr.rel target = $region3
    $region8: #{a_call__.1} parent=1 // loop_exit
      _
    %325 = vsyncpa [#allocation3], 1
    %s326 = scalar_lea.sflag [#allocation3], 1
    %327 = vsyncpa %s326, 1
    %328 = vsyncpa [#allocation4], 1
    %s329 = scalar_lea.sflag [#allocation4], 1
    %330 = vsyncpa %s329, 1

</llo_original>
